<compile_context>
chip_gen: v7x
topology: tpu7x:2x2x1
jax: 0.10.0
libtpu: 0.0.40
codegen_flags: <defaults>
</compile_context>

<pallas_src>
import jax
import jax.numpy as jnp
from jax.experimental import pallas as pl
from jax.experimental.pallas import tpu as pltpu


# ---------------------------------------------------------------------------
# helpers
# ---------------------------------------------------------------------------
def _round_up(x: int, m: int) -> int:
    return (x + m - 1) // m * m


def _pick_tile(n: int, unit: int, cap: int):
    """Tile (multiple of `unit`, <= cap) and the padded extent it divides.

    Prefers tiles that divide the unit-aligned extent exactly (no extra padding
    and no post-call slice copy) as long as they are not pathologically small.
    """
    n_up = _round_up(n, unit)
    if n_up <= cap:
        return n_up, n_up
    for t in range(cap, cap // 2 - 1, -unit):
        if n_up % t == 0:
            return t, n_up
    return cap, _round_up(n_up, cap)


def _chip_config():
    """(row-tile cap, vocab-tile cap, vmem_limit_bytes) per TPU generation."""
    vmem_bytes = 64 * 1024 * 1024
    try:
        info = pltpu.get_tpu_info()
        vmem_bytes = int(getattr(info, "vmem_capacity_bytes", vmem_bytes) or vmem_bytes)
    except Exception:
        pass
    if vmem_bytes >= 96 * 1024 * 1024:          # v5e / v6e: 128 MiB VMEM
        return 256, 4096, 96 * 1024 * 1024
    return 256, 2048, 48 * 1024 * 1024          # v7x: 64 MiB VMEM


# ---------------------------------------------------------------------------
# kernel: one (tm, D) @ (D, tv) projection tile + bias
# ---------------------------------------------------------------------------
def _proj_kernel(x_ref, w_ref, b_ref, out_ref):
    # x_ref: (tm, D)  activation rows (small operand, re-streamed per vocab tile)
    # w_ref: (D, tv)  pre-transposed Linear weight tile (resident over the m sweep)
    # b_ref: (1, tv)  f32 bias tile
    y = jnp.dot(x_ref[...], w_ref[...], preferred_element_type=jnp.float32)
    out_ref[...] = (y + b_ref[...]).astype(out_ref.dtype)


# ---------------------------------------------------------------------------
# forward wrapper
# ---------------------------------------------------------------------------
def word2vec_forward(inputs, emb_table, lin_w, lin_b, *, bag_size,
                     skip_gram=True, compute_dtype=jnp.bfloat16,
                     out_dtype=jnp.float32):
    """Pallas equivalent of Word2VecModel.forward.

    inputs   : int32  (batch, bag_size) token ids
    emb_table: float32 (vocab_size, embedding_dim)   (nn.Embedding.weight)
    lin_w    : float32 (vocab_size, embedding_dim)   (nn.Linear.weight, native layout)
    lin_b    : float32 (vocab_size,)                 (nn.Linear.bias)
    compute_dtype: MXU input dtype (bf16 default; f32 accumulation either way).
    out_dtype    : logits dtype (f32 default; bf16 halves output HBM traffic).
    """
    batch, bag = inputs.shape
    assert bag == bag_size
    V, D = emb_table.shape
    assert lin_w.shape == (V, D)
    assert lin_b.shape == (V,)

    tm_cap, tv_cap, vmem_limit = _chip_config()

    # Embedding gather hoisted to one batched XLA gather; the Pallas kernel only
    # sees dense, tileable activation rows.
    ids = inputs.reshape(-1).astype(jnp.int32)
    x = jnp.take(emb_table, ids, axis=0)                         # (batch*bag, D) f32

    if skip_gram:
        rows = x                                                 # (batch*bag, D)
    else:
        # CBOW bag-mean hoisted out of the vocab sweep (f32 reduce, cast once).
        rows = x.reshape(batch, bag, D).sum(axis=1) / float(bag_size)   # (batch, D)

    N = rows.shape[0]
    tm, n_pad = _pick_tile(N, 8, tm_cap)
    tv, v_pad = _pick_tile(V, 128, tv_cap)

    if n_pad != N:
        rows = jnp.pad(rows, ((0, n_pad - N), (0, 0)))
    rows = rows.astype(compute_dtype)

    # One-time host-side transpose of the static weight to MXU-native (D, V),
    # pad vocab to the tile grid, cast to the compute dtype.
    # TODO(synk): an fp8 weight path (per-tile scale folded into the bias add)
    # would further quarter weight DMA on v7x; not implemented here.
    w_t = lin_w.T                                                # (D, V)
    b_p = lin_b.reshape(1, V).astype(jnp.float32)
    if v_pad != V:
        w_t = jnp.pad(w_t, ((0, 0), (0, v_pad - V)))
        b_p = jnp.pad(b_p, ((0, 0), (0, v_pad - V)))
    w_t = w_t.astype(compute_dtype)

    out = pl.pallas_call(
        _proj_kernel,
        out_shape=jax.ShapeDtypeStruct((n_pad, v_pad), out_dtype),
        grid_spec=pltpu.PrefetchScalarGridSpec(
            num_scalar_prefetch=0,
            # Vocab OUTER, rows INNER: the weight tile's block index is constant
            # over the inner axis, so the big operand streams from HBM once.
            grid=(v_pad // tv, n_pad // tm),
            in_specs=[
                pl.BlockSpec((tm, D), lambda v, m: (m, 0)),      # activations (small)
                pl.BlockSpec((D, tv), lambda v, m: (0, v)),      # weight (resident over m)
                pl.BlockSpec((1, tv), lambda v, m: (0, v)),      # bias
            ],
            out_specs=pl.BlockSpec((tm, tv), lambda v, m: (m, v)),
        ),
        compiler_params=pltpu.CompilerParams(
            dimension_semantics=("parallel", "parallel"),
            vmem_limit_bytes=vmem_limit,
        ),
    )(rows, w_t, b_p)

    if n_pad != N or v_pad != V:
        out = out[:N, :V]

    if skip_gram:
        return out.reshape(batch, bag, V)
    return out


# ---------------------------------------------------------------------------
# self-test
# ---------------------------------------------------------------------------
if __name__ == "__main__":
    vocab_size, embedding_dim, batch_size, bag_size = 128, 32, 2, 8

    key = jax.random.PRNGKey(0)
    k1, k2, k3, k4 = jax.random.split(key, 4)

    emb_table = jax.random.normal(k1, (vocab_size, embedding_dim), jnp.float32)
    bound = 1.0 / (embedding_dim ** 0.5)
    lin_w = jax.random.uniform(k2, (vocab_size, embedding_dim), jnp.float32, -bound, bound)
    lin_b = jax.random.uniform(k3, (vocab_size,), jnp.float32, -bound, bound)

    inputs = jax.random.randint(k4, (batch_size, bag_size), 0, vocab_size, dtype=jnp.int32)

    hi = jax.lax.Precision.HIGHEST
    x32 = emb_table[inputs]                                       # (B, bag, D) f32

    # ---- skip-gram, f32 compute path vs. f32 reference ---------------------
    out_sg_f32 = word2vec_forward(inputs, emb_table, lin_w, lin_b,
                                  bag_size=bag_size, skip_gram=True,
                                  compute_dtype=jnp.float32)
    out_sg_f32 = jax.block_until_ready(out_sg_f32)
    ref_sg_f32 = jnp.einsum("bsd,vd->bsv", x32, lin_w, precision=hi) + lin_b
    assert out_sg_f32.shape == (batch_size, bag_size, vocab_size)
    assert jnp.allclose(out_sg_f32, ref_sg_f32, atol=1e-4, rtol=1e-4)

    # ---- skip-gram, default bf16 compute path vs. bf16-cast reference ------
    xb = x32.astype(jnp.bfloat16).astype(jnp.float32)
    wb = lin_w.astype(jnp.bfloat16).astype(jnp.float32)
    out_sg = word2vec_forward(inputs, emb_table, lin_w, lin_b,
                              bag_size=bag_size, skip_gram=True)
    out_sg = jax.block_until_ready(out_sg)
    ref_sg = jnp.einsum("bsd,vd->bsv", xb, wb, precision=hi) + lin_b
    assert out_sg.shape == (batch_size, bag_size, vocab_size)
    assert jnp.allclose(out_sg, ref_sg, atol=1e-2, rtol=1e-2)

    # ---- CBOW, default bf16 compute path ------------------------------------
    mean32 = x32.sum(axis=1) / bag_size
    mb = mean32.astype(jnp.bfloat16).astype(jnp.float32)
    out_cb = word2vec_forward(inputs, emb_table, lin_w, lin_b,
                              bag_size=bag_size, skip_gram=False)
    out_cb = jax.block_until_ready(out_cb)
    ref_cb = jnp.einsum("bd,vd->bv", mb, wb, precision=hi) + lin_b
    assert out_cb.shape == (batch_size, vocab_size)
    assert jnp.allclose(out_cb, ref_cb, atol=1e-2, rtol=1e-2)

    # TODO(synk): model.inference() is a pure embedding gather + reshape (no
    # matmul); it maps to the same batched XLA gather used to stage activations
    # above and is not a separate Pallas kernel.
    print("KERNEL_OK")
</pallas_src>

<mosaic_0001>
module attributes {stable_mosaic.version = 11 : i64} {
  func.func @_proj_kernel(%arg0: i32, %arg1: i32, %arg2: memref<16x32xf32, #tpu.memory_space<vmem>>, %arg3: memref<32x128xf32, #tpu.memory_space<vmem>>, %arg4: memref<1x128xf32, #tpu.memory_space<vmem>>, %arg5: memref<16x128xf32, #tpu.memory_space<vmem>>) attributes {dimension_semantics = [#tpu.dimension_semantics<parallel>, #tpu.dimension_semantics<parallel>], iteration_bounds = array<i64: 1, 1>, scalar_prefetch = 0 : i64, scratch_operands = 0 : i64, tpu.core_type = #tpu.core_type<tc>, window_params = [{transform_indices = @transform_0, window_bounds = array<i64: 16, 32>}, {transform_indices = @transform_1, window_bounds = array<i64: 32, 128>}, {transform_indices = @transform_2, window_bounds = array<i64: 1, 128>}, {transform_indices = @transform_3, window_bounds = array<i64: 16, 128>}]} {
    %c0 = arith.constant 0 : index
    %c0_0 = arith.constant 0 : index
    %0 = vector.load %arg2[%c0, %c0_0] : memref<16x32xf32, #tpu.memory_space<vmem>>, vector<16x32xf32>
    %c0_1 = arith.constant 0 : index
    %c0_2 = arith.constant 0 : index
    %1 = vector.load %arg3[%c0_1, %c0_2] : memref<32x128xf32, #tpu.memory_space<vmem>>, vector<32x128xf32>
    %cst = arith.constant dense<0.000000e+00> : vector<16x128xf32>
    %2 = tpu.matmul %0, %1, %cst {dimension_numbers = #tpu.dot_dimension_numbers<[1], [0], [0], [1], [0, 0, 1, 1], [], []>} : vector<16x32xf32>, vector<32x128xf32>, vector<16x128xf32> -> vector<16x128xf32>
    %c0_3 = arith.constant 0 : index
    %c0_4 = arith.constant 0 : index
    %3 = vector.load %arg4[%c0_3, %c0_4] : memref<1x128xf32, #tpu.memory_space<vmem>>, vector<1x128xf32>
    %4 = vector.broadcast %3 : vector<1x128xf32> to vector<16x128xf32>
    %5 = arith.addf %2, %4 : vector<16x128xf32>
    %c0_5 = arith.constant 0 : index
    %c0_6 = arith.constant 0 : index
    %6 = vector.load %arg5[%c0_5, %c0_6] : memref<16x128xf32, #tpu.memory_space<vmem>>, vector<16x128xf32>
    tpu.vector_store %arg5[%c0_5, %c0_6], %5 {strides = array<i32>} : memref<16x128xf32, #tpu.memory_space<vmem>>, vector<16x128xf32>,
    return
  }
  func.func @transform_0(%arg0: i32, %arg1: i32) -> (i32, i32) {
    %c0_i32 = arith.constant 0 : i32
    %c0_i32_0 = arith.constant 0 : i32
    return %arg1, %c0_i32 : i32, i32
  }
  func.func @transform_1(%arg0: i32, %arg1: i32) -> (i32, i32) {
    %c0_i32 = arith.constant 0 : i32
    %c0_i32_0 = arith.constant 0 : i32
    return %c0_i32, %arg0 : i32, i32
  }
  func.func @transform_2(%arg0: i32, %arg1: i32) -> (i32, i32) {
    %c0_i32 = arith.constant 0 : i32
    %c0_i32_0 = arith.constant 0 : i32
    return %c0_i32, %arg0 : i32, i32
  }
  func.func @transform_3(%arg0: i32, %arg1: i32) -> (i32, i32) {
    %c0_i32 = arith.constant 0 : i32
    return %arg1, %arg0 : i32, i32
  }
}

</mosaic_0001>

<llo_original>
// kernel: tpu_custom_call.1
$region0: #{tpu_custom_call.1}
  #allocation0 [shape = 'u32[]', space=smem, size = 0x4, offset = 0x4, fixed_abs, tag = 'smem constant byte address 0x4 - core index']
  #allocation1 [shape = 'u32[144,128]{1,0:T(1,128)}', space=vmem, size = 0x12000, scoped, tag = 'internal scratch']
  %s0 = inlined_call_operand.hbm [shape: f32[16,32], index: 0, kind: input, shape index: {}]
  %s1 = inlined_call_operand.hbm [shape: f32[32,128], index: 1, kind: input, shape index: {}]
  %s2 = inlined_call_operand.vmem [shape: f32[1,128], index: 2, kind: input, shape index: {}]
  %s3 = inlined_call_operand.hbm [shape: f32[16,128], index: 3, kind: output, shape index: {}]
  %s4 = sld [smem:[#allocation0]]
  $region30: #{tpu_custom_call.1} parent=0
    _
  %s6 = ssub.s32 1, %s4
  %s7 = scalar_select 0, %s6, %s4
  $region1: #{tpu_custom_call.1} parent=0
    #allocation2 [shape = 'u8[8192]{0}', space=vmem, size = 0x2000, scoped, tag = 'input window, operand 0, single buffered']
    #allocation3 [shape = 's32[1]{0}', space=sflag, size = 0x4, scoped, tag = 'scoped memory for tpu_custom_call.1']
    #allocation4 [shape = 's32[1]{0}', space=sflag, size = 0x4, scoped, tag = 'scoped memory for tpu_custom_call.1']
    #allocation5 [shape = 'u8[16384]{0}', space=vmem, size = 0x4000, scoped, tag = 'input window, operand 1, single buffered']
    #allocation6 [shape = 's32[1]{0}', space=sflag, size = 0x4, scoped, tag = 'scoped memory for tpu_custom_call.1']
    #allocation7 [shape = 'u8[8192]{0}', space=vmem, size = 0x2000, scoped, tag = 'output window, operand 0, single buffered']
    %8 = vsyncpa [#allocation3], 0
    %9 = vsyncpa [#allocation6], 0
    %10 = vsyncpa [#allocation4], 0
    // Predicated region
    $region2: #{tpu_custom_call.1} parent=1 // pred_check
      _
    $region3: #{tpu_custom_call.1} parent=1 // pred_check_branch
      %12 = sbr.rel (0) target = $region5
    $region4: #{tpu_custom_call.1} parent=1 // pred_region
      %s14 = ssub.s32 256, 256
      %15 = vsyncadd [#allocation3], %s14
      %s16 = sshll.u32 [#allocation2], 4
      %s17 = int_to_ptr.vmem [resolvable:$true] %s16
      %22 = dma.hbm_to_vmem [thread:$0]  %s0, 256, %s17, [#allocation3], 128, 128, 8
    $region5: #{tpu_custom_call.1} parent=1 // pred_fallthru
      _
    // Predicated region
    $region6: #{tpu_custom_call.1} parent=1 // pred_check
      _
    $region7: #{tpu_custom_call.1} parent=1 // pred_check_branch
      %24 = sbr.rel (0) target = $region9
    $region8: #{tpu_custom_call.1} parent=1 // pred_region
      %s26 = ssub.s32 512, 512
      %27 = vsyncadd [#allocation6], %s26
      %s28 = sshll.u32 [#allocation5], 4
      %s29 = int_to_ptr.vmem [resolvable:$true] %s28
      %34 = dma.hbm_to_vmem [thread:$0]  %s1, 512, %s29, [#allocation6], 128, 128, 8
    $region9: #{tpu_custom_call.1} parent=1 // pred_fallthru
      _
    // Predicated region
    $region10: #{tpu_custom_call.1} parent=1 // pred_check
      _
    $region11: #{tpu_custom_call.1} parent=1 // pred_check_branch
      %36 = sbr.rel (0) target = $region13
    $region12: #{tpu_custom_call.1} parent=1 // pred_region
      _
    $region13: #{tpu_custom_call.1} parent=1 // pred_fallthru
      _
    // Predicated region
    $region14: #{tpu_custom_call.1} parent=1 // pred_check
      _
    $region15: #{tpu_custom_call.1} parent=1 // pred_check_branch
      %38 = sbr.rel (0) target = $region17
    $region16: #{tpu_custom_call.1} parent=1 // pred_region
      %39 = dma.done [#allocation3], 256
    $region17: #{tpu_custom_call.1} parent=1 // pred_fallthru
      _
    // Predicated region
    $region18: #{tpu_custom_call.1} parent=1 // pred_check
      _
    $region19: #{tpu_custom_call.1} parent=1 // pred_check_branch
      %41 = sbr.rel (0) target = $region21
    $region20: #{tpu_custom_call.1} parent=1 // pred_region
      %42 = dma.done [#allocation6], 512
    $region21: #{tpu_custom_call.1} parent=1 // pred_fallthru
      _
    %v43 = vld [vmem:[#allocation2] sm:$0xff]
    %v44 = vld [vmem:[#allocation2 + $0x8] sm:$0xff]
    %v45 = vld [vmem:[#allocation5] sm:$0xff]
    %v46 = vld [vmem:[#allocation5 + $0x8] sm:$0xff]
    %v47 = vld [vmem:[#allocation5 + $0x10] sm:$0xff]
    %v48 = vld [vmem:[#allocation5 + $0x18] sm:$0xff]
    %v49 = vld [vmem:[%s2] sm:$0x1]
    %v51 = vlaneseq
    %v52 = vshrl.u32 %v51, 7
    %v53 = vsub.s32 0, %v52
    %v54 = vrot.slane %v49, %v53
    %vm56 = vcmask 261120
    %v58 = vsel %vm56, %v43, 0
    %v61 = vsel %vm56, %v44, 0
    %63 = vmatprep.subr.mxu0 0.0
    %64 = vmatpush1.msra.mxu0 %v45
    %65 = vmatprep.subr.mxu0 0.0
    %66 = vmatpush1.msra.mxu0 %v46
    %67 = vmatprep.subr.mxu0 0.0
    %68 = vmatpush1.msra.mxu0 %v47
    %69 = vmatprep.subr.mxu0 0.0
    %70 = vmatpush1.msra.mxu0 %v48
    %71 = vmatprep.subr.mxu0 0.0
    %72 = vmatpush1.msra.mxu0 0.0
    %73 = vmatprep.subr.mxu0 0.0
    %74 = vmatpush1.msra.mxu0 0.0
    %75 = vmatprep.subr.mxu0 0.0
    %76 = vmatpush1.msra.mxu0 0.0
    %77 = vmatprep.subr.mxu0 0.0
    %78 = vmatpush1.msra.mxu0 0.0
    %79 = vmatprep.subr.mxu0 0.0
    %80 = vmatpush1.msra.mxu0 0.0
    %81 = vmatprep.subr.mxu0 0.0
    %82 = vmatpush1.msra.mxu0 0.0
    %83 = vmatprep.subr.mxu0 0.0
    %84 = vmatpush1.msra.mxu0 0.0
    %85 = vmatprep.subr.mxu0 0.0
    %86 = vmatpush1.msra.mxu0 0.0
    %87 = vmatprep.subr.mxu0 0.0
    %88 = vmatpush1.msra.mxu0 0.0
    %89 = vmatprep.subr.mxu0 0.0
    %90 = vmatpush1.msra.mxu0 0.0
    %91 = vmatprep.subr.mxu0 0.0
    %92 = vmatpush1.msra.mxu0 0.0
    %93 = vmatprep.subr.mxu0 0.0
    %94 = vmatpush1.msra.mxu0 0.0
    %95 = vmatprep.subr.mxu0 0.0
    %96 = vmatpush1.msra.mxu0 0.0
    %97 = vmatprep.subr.mxu0 0.0
    %98 = vmatpush1.msra.mxu0 0.0
    %99 = vmatprep.subr.mxu0 0.0
    %100 = vmatpush1.msra.mxu0 0.0
    %101 = vmatprep.subr.mxu0 0.0
    %102 = vmatpush1.msra.mxu0 0.0
    %103 = vmatprep.subr.mxu0 0.0
    %104 = vmatpush1.msra.mxu0 0.0
    %105 = vmatprep.subr.mxu0 0.0
    %106 = vmatpush1.msra.mxu0 0.0
    %107 = vmatprep.subr.mxu0 0.0
    %108 = vmatpush1.msra.mxu0 0.0
    %109 = vmatprep.subr.mxu0 0.0
    %110 = vmatpush1.msra.mxu0 0.0
    %111 = vmatprep.subr.mxu0 0.0
    %112 = vmatpush1.msra.mxu0 0.0
    %113 = vmatprep.subr.mxu0 0.0
    %114 = vmatpush1.msra.mxu0 0.0
    %115 = vmatprep.subr.mxu0 0.0
    %116 = vmatpush1.msra.mxu0 0.0
    %117 = vmatprep.subr.mxu0 0.0
    %118 = vmatpush1.msra.mxu0 0.0
    %119 = vmatprep.subr.mxu0 0.0
    %120 = vmatpush1.msra.mxu0 0.0
    %121 = vmatprep.subr.mxu0 0.0
    %122 = vmatpush1.msra.mxu0 0.0
    %123 = vmatprep.subr.mxu0 0.0
    %124 = vmatpush1.msra.mxu0 0.0
    %125 = vmatprep.subr.mxu0 0.0
    %126 = vmatpush1.msra.mxu0 0.0
    %127 = vmatprep.mubr.f32.mxu0 0.0
    %128 = vmatmul.mubr.f32.gmra.mrb[0].mxu0 %v58
    %v129 = vpop.f32.mrb[0].mxu0
    %v130 = vadd.f32 %v54, %v129
    %v131 = vpop.f32.mrb[0].mxu0
    %132 = vmatprep.mubr.f32.mxu0 0.0
    %133 = vmatmul.mubr.f32.gmra.mrb[0].mxu0 %v61
    %v134 = vpop.f32.mrb[0].mxu0
    %v135 = vadd.f32 %v54, %v134
    %v136 = vpop.f32.mrb[0].mxu0
    %137 = vdwg.mxu0
    %138 = vst [vmem:[#allocation7] sm:$0xff] %v130
    %139 = vst [vmem:[#allocation7 + $0x8] sm:$0xff] %v135
    // Predicated region
    $region22: #{tpu_custom_call.1} parent=1 // pred_check
      _
    $region23: #{tpu_custom_call.1} parent=1 // pred_check_branch
      %141 = sbr.rel (0) target = $region25
    $region24: #{tpu_custom_call.1} parent=1 // pred_region
      %s143 = ssub.s32 256, 256
      %144 = vsyncadd [#allocation4], %s143
      %s145 = sshll.u32 [#allocation7], 4
      %s146 = int_to_ptr.vmem [resolvable:$true] %s145
      %151 = dma.vmem_to_hbm [thread:$0]  %s146, 256, %s3, [#allocation4], 128, 128, 8
    $region25: #{tpu_custom_call.1} parent=1 // pred_fallthru
      _
    // Predicated region
    $region26: #{tpu_custom_call.1} parent=1 // pred_check
      _
    $region27: #{tpu_custom_call.1} parent=1 // pred_check_branch
      %153 = sbr.rel (0) target = $region29
    $region28: #{tpu_custom_call.1} parent=1 // pred_region
      %154 = dma.done [#allocation4], 256
    $region29: #{tpu_custom_call.1} parent=1 // pred_fallthru
      _
    %155 = vsyncpa [#allocation3], 1
    %156 = vsyncpa [#allocation6], 1
    %157 = vsyncpa [#allocation4], 1

</llo_original>
